<compile_context>
chip_gen: v6e
topology: v6e:2x2x1
jax: 0.10.0
libtpu: 0.0.40
codegen_flags: <defaults>
</compile_context>

<pallas_src>
import functools

import jax
import jax.numpy as jnp
from jax.experimental import pallas as pl
from jax.experimental.pallas import tpu as pltpu


def _scmm_kernel(a_ref, x_ref, wm_ref, o_ref, *, r):
    # a_ref : (1,)        scalar 'a' in SMEM
    # x_ref : (tm, r*k)   r original x-rows packed per row (lane-dense)
    # wm_ref: (r*k, 2*r)  block-diagonal [w-blocks | m-blocks], resident
    # o_ref : (tm, r)     r fused outputs per packed row (lane-dense)
    a = a_ref[0]
    res = jnp.dot(x_ref[...], wm_ref[...], preferred_element_type=jnp.float32)
    o_ref[...] = jnp.minimum(res[:, :r], a) + res[:, r:]


def scmm_forward(x, w, m, a, *, tile_rows=8192):
    """x: (n, k) f32, w/m: (k, 1) f32, a: python float or 0-d array."""
    n, k = x.shape
    x = x.astype(jnp.float32)
    w = jnp.asarray(w, jnp.float32).reshape(k, 1)
    m = jnp.asarray(m, jnp.float32).reshape(k, 1)
    a_arr = jnp.asarray(a, dtype=jnp.float32).reshape(1)

    # Rows folded per packed row: keep contraction depth r*k within one MXU
    # weight panel (<= 256) and output width 2r <= 128 lanes.
    r = max(1, min(64, 256 // max(k, 1)))

    # Block-diagonal fused weights: (r*k, 2r).
    eye_r = jnp.eye(r, dtype=jnp.float32)
    wm = jnp.concatenate([jnp.kron(eye_r, w), jnp.kron(eye_r, m)], axis=1)

    # Clamp the tile so the input block stays ~<= 2 MiB (~4 MiB double-buffered);
    # tile_rows must be a multiple of 8*r so tm = tile_rows // r is sublane-legal.
    bytes_per_row = 4 * k
    cap = max(8 * r, (2 * 1024 * 1024 // bytes_per_row) // (8 * r) * (8 * r))
    tile_rows = max(8 * r, min((tile_rows // (8 * r)) * (8 * r), cap))

    if n <= tile_rows:
        # Single full block (always a legal block shape).
        n_pad = ((n + r - 1) // r) * r
    else:
        # Pad the batch to a multiple of the tile; padded rows are sliced off.
        n_pad = ((n + tile_rows - 1) // tile_rows) * tile_rows
    if n_pad != n:
        x = jnp.pad(x, ((0, n_pad - n), (0, 0)))

    x2 = x.reshape(n_pad // r, r * k)          # free, contiguous reshape
    tm = min(n_pad, tile_rows) // r
    grid = (n_pad // (tm * r),)

    out2 = pl.pallas_call(
        functools.partial(_scmm_kernel, r=r),
        out_shape=jax.ShapeDtypeStruct((n_pad // r, r), jnp.float32),
        grid=grid,
        in_specs=[
            pl.BlockSpec(memory_space=pltpu.SMEM),            # a (scalar)
            pl.BlockSpec((tm, r * k), lambda i: (i, 0)),      # packed x tile
            pl.BlockSpec((r * k, 2 * r), lambda i: (0, 0)),   # fused weights
        ],
        out_specs=pl.BlockSpec((tm, r), lambda i: (i, 0)),
        compiler_params=pltpu.CompilerParams(
            # Batch axis is embarrassingly parallel -> shard across TCs.
            dimension_semantics=("parallel",),
            vmem_limit_bytes=32 * 1024 * 1024,
        ),
    )(a_arr, x2, wm)

    out = out2.reshape(n_pad, 1)               # free, contiguous reshape
    return out[:n] if n_pad != n else out


if __name__ == "__main__":
    key = jax.random.PRNGKey(0)
    kx, kw, km, kx2 = jax.random.split(key, 4)

    k = 32
    a_val = 2.5

    # Parameter init mirroring torch.randint(0, 3, (k, 1)).float()
    w = jax.random.randint(kw, (k, 1), 0, 3).astype(jnp.float32)
    m = jax.random.randint(km, (k, 1), 0, 3).astype(jnp.float32)

    # Small shape consistent with the module's toy usage.
    n_small = 8
    x_small = jax.random.normal(kx, (n_small, k), dtype=jnp.float32)
    out_small = jax.block_until_ready(scmm_forward(x_small, w, m, a_val))
    ref_small = jnp.minimum(x_small @ w, jnp.float32(a_val)) + x_small @ m
    assert out_small.shape == (n_small, 1)
    assert jnp.allclose(out_small, ref_small, atol=2e-4, rtol=1e-4)

    # Larger, non-multiple batch exercising the gridded / padded / parallel path.
    n_big = 4104
    x_big = jax.random.normal(kx2, (n_big, k), dtype=jnp.float32)
    out_big = jax.block_until_ready(scmm_forward(x_big, w, m, a_val, tile_rows=1024))
    ref_big = jnp.minimum(x_big @ w, jnp.float32(a_val)) + x_big @ m
    assert out_big.shape == (n_big, 1)
    assert jnp.allclose(out_big, ref_big, atol=2e-4, rtol=1e-4)

    print("KERNEL_OK")
</pallas_src>

<mosaic_0001>
module attributes {stable_mosaic.version = 11 : i64} {
  func.func @_scmm_kernel(%arg0: i32, %arg1: memref<1xf32, #tpu.memory_space<smem>>, %arg2: memref<1x256xf32, #tpu.memory_space<vmem>>, %arg3: memref<256x16xf32, #tpu.memory_space<vmem>>, %arg4: memref<1x8xf32, #tpu.memory_space<vmem>>) attributes {dimension_semantics = [#tpu.dimension_semantics<parallel>], iteration_bounds = array<i64: 1>, scalar_prefetch = 0 : i64, scratch_operands = 0 : i64, tpu.core_type = #tpu.core_type<tc>, window_params = [{transform_indices = @transform_0, window_bounds = array<i64: 1>}, {transform_indices = @transform_1, window_bounds = array<i64: 1, 256>}, {pipeline_mode = #tpu.pipeline_mode<synchronous>, transform_indices = @transform_2, window_bounds = array<i64: 256, 16>}, {transform_indices = @transform_3, window_bounds = array<i64: 1, 8>}]} {
    %c0 = arith.constant 0 : index
    %0 = memref.load %arg1[%c0] : memref<1xf32, #tpu.memory_space<smem>>
    %c0_0 = arith.constant 0 : index
    %c0_1 = arith.constant 0 : index
    %1 = vector.load %arg2[%c0_0, %c0_1] : memref<1x256xf32, #tpu.memory_space<vmem>>, vector<1x256xf32>
    %c0_2 = arith.constant 0 : index
    %c0_3 = arith.constant 0 : index
    %2 = vector.load %arg3[%c0_2, %c0_3] : memref<256x16xf32, #tpu.memory_space<vmem>>, vector<256x16xf32>
    %cst = arith.constant dense<0.000000e+00> : vector<1x16xf32>
    %3 = tpu.matmul %1, %2, %cst {dimension_numbers = #tpu.dot_dimension_numbers<[1], [0], [0], [1], [0, 0, 1, 1], [], []>} : vector<1x256xf32>, vector<256x16xf32>, vector<1x16xf32> -> vector<1x16xf32>
    %4 = vector.extract_strided_slice %3 {offsets = [0, 0], sizes = [1, 8], strides = [1, 1]} : vector<1x16xf32> to vector<1x8xf32>
    %5 = vector.broadcast %0 : f32 to vector<1x8xf32>
    %6 = arith.minimumf %4, %5 : vector<1x8xf32>
    %7 = vector.extract_strided_slice %3 {offsets = [0, 8], sizes = [1, 8], strides = [1, 1]} : vector<1x16xf32> to vector<1x8xf32>
    %8 = arith.addf %6, %7 : vector<1x8xf32>
    %c0_4 = arith.constant 0 : index
    %c0_5 = arith.constant 0 : index
    %9 = vector.load %arg4[%c0_4, %c0_5] : memref<1x8xf32, #tpu.memory_space<vmem>>, vector<1x8xf32>
    tpu.vector_store %arg4[%c0_4, %c0_5], %8 {strides = array<i32>} : memref<1x8xf32, #tpu.memory_space<vmem>>, vector<1x8xf32>,
    return
  }
  func.func @transform_0(%arg0: i32) -> i32 {
    %c0_i32 = arith.constant 0 : i32
    %c0_i32_0 = arith.constant 0 : i32
    return %c0_i32 : i32
  }
  func.func @transform_1(%arg0: i32) -> (i32, i32) {
    %c0_i32 = arith.constant 0 : i32
    %c0_i32_0 = arith.constant 0 : i32
    return %arg0, %c0_i32 : i32, i32
  }
  func.func @transform_2(%arg0: i32) -> (i32, i32) {
    %c0_i32 = arith.constant 0 : i32
    %c0_i32_0 = arith.constant 0 : i32
    %c0_i32_1 = arith.constant 0 : i32
    return %c0_i32, %c0_i32_0 : i32, i32
  }
  func.func @transform_3(%arg0: i32) -> (i32, i32) {
    %c0_i32 = arith.constant 0 : i32
    %c0_i32_0 = arith.constant 0 : i32
    return %arg0, %c0_i32 : i32, i32
  }
}

</mosaic_0001>

<llo_original>
// kernel: tpu_custom_call.1
$region0: #{tpu_custom_call.1}
  #allocation0 [shape = 'u32[]', space=smem, size = 0x4, offset = 0x4, fixed_abs, tag = 'smem constant byte address 0x4 - core index']
  #allocation1 [shape = 'u32[144,128]{1,0:T(1,128)}', space=vmem, size = 0x12000, scoped, tag = 'internal scratch']
  #allocation2 [shape = 'f32[1]{0:T(128)S(6)}', space=smem, size = 0x200, scoped, tag = 'scoped memory for tpu_custom_call.1']
  %s0 = inlined_call_operand.<no memory space> [shape: f32[1], index: 0, kind: input, shape index: {}]
  %s1 = inlined_call_operand.vmem [shape: f32[1,256], index: 1, kind: input, shape index: {}]
  %s2 = inlined_call_operand.vmem [shape: f32[256,16], index: 2, kind: input, shape index: {}]
  %s3 = inlined_call_operand.hbm [shape: f32[1,8], index: 3, kind: output, shape index: {}]
  %s4 = sld [smem:[#allocation0]]
  $region22: #{tpu_custom_call.1} parent=0
    _
  %s6 = ssub.s32 1, %s4
  %s7 = scalar_select 0, %s6, %s4
  %8 = sst [smem:[#allocation2]] %s0
  $region1: #{tpu_custom_call.1} parent=0
    #allocation3 [shape = 'u8[512]{0}', space=vmem, size = 0x400, scoped, tag = 'output window, operand 0, single buffered']
    #allocation4 [shape = 's32[1]{0}', space=sflag, size = 0x4, scoped, tag = 'scoped memory for tpu_custom_call.1']
    %9 = vsyncpa [#allocation4], 0
    // Predicated region
    $region2: #{tpu_custom_call.1} parent=1 // pred_check
      _
    $region3: #{tpu_custom_call.1} parent=1 // pred_check_branch
      %11 = sbr.rel (0) target = $region5
    $region4: #{tpu_custom_call.1} parent=1 // pred_region
      _
    $region5: #{tpu_custom_call.1} parent=1 // pred_fallthru
      _
    // Predicated region
    $region6: #{tpu_custom_call.1} parent=1 // pred_check
      _
    $region7: #{tpu_custom_call.1} parent=1 // pred_check_branch
      %13 = sbr.rel (0) target = $region9
    $region8: #{tpu_custom_call.1} parent=1 // pred_region
      _
    $region9: #{tpu_custom_call.1} parent=1 // pred_fallthru
      _
    // Predicated region
    $region10: #{tpu_custom_call.1} parent=1 // pred_check
      _
    $region11: #{tpu_custom_call.1} parent=1 // pred_check_branch
      %15 = sbr.rel (0) target = $region13
    $region12: #{tpu_custom_call.1} parent=1 // pred_region
      _
    $region13: #{tpu_custom_call.1} parent=1 // pred_fallthru
      _
    %s16 = sld [smem:[#allocation2]]
    %v17 = vld [vmem:[%s1] sm:$0x3]
    %v18 = vld [vmem:[%s2] sm:$0xff]
    %v19 = vld [vmem:[%s2 + $0x8] sm:$0xff]
    %v20 = vld [vmem:[%s2 + $0x10] sm:$0xff]
    %v21 = vld [vmem:[%s2 + $0x18] sm:$0xff]
    %v22 = vld [vmem:[%s2 + $0x20] sm:$0xff]
    %v23 = vld [vmem:[%s2 + $0x28] sm:$0xff]
    %v24 = vld [vmem:[%s2 + $0x30] sm:$0xff]
    %v25 = vld [vmem:[%s2 + $0x38] sm:$0xff]
    %v26 = vld [vmem:[%s2 + $0x40] sm:$0xff]
    %v27 = vld [vmem:[%s2 + $0x48] sm:$0xff]
    %v28 = vld [vmem:[%s2 + $0x50] sm:$0xff]
    %v29 = vld [vmem:[%s2 + $0x58] sm:$0xff]
    %v30 = vld [vmem:[%s2 + $0x60] sm:$0xff]
    %v31 = vld [vmem:[%s2 + $0x68] sm:$0xff]
    %v32 = vld [vmem:[%s2 + $0x70] sm:$0xff]
    %v33 = vld [vmem:[%s2 + $0x78] sm:$0xff]
    %v34 = vld [vmem:[%s2 + $0x80] sm:$0xff]
    %v35 = vld [vmem:[%s2 + $0x88] sm:$0xff]
    %v36 = vld [vmem:[%s2 + $0x90] sm:$0xff]
    %v37 = vld [vmem:[%s2 + $0x98] sm:$0xff]
    %v38 = vld [vmem:[%s2 + $0xa0] sm:$0xff]
    %v39 = vld [vmem:[%s2 + $0xa8] sm:$0xff]
    %v40 = vld [vmem:[%s2 + $0xb0] sm:$0xff]
    %v41 = vld [vmem:[%s2 + $0xb8] sm:$0xff]
    %v42 = vld [vmem:[%s2 + $0xc0] sm:$0xff]
    %v43 = vld [vmem:[%s2 + $0xc8] sm:$0xff]
    %v44 = vld [vmem:[%s2 + $0xd0] sm:$0xff]
    %v45 = vld [vmem:[%s2 + $0xd8] sm:$0xff]
    %v46 = vld [vmem:[%s2 + $0xe0] sm:$0xff]
    %v47 = vld [vmem:[%s2 + $0xe8] sm:$0xff]
    %v48 = vld [vmem:[%s2 + $0xf0] sm:$0xff]
    %v49 = vld [vmem:[%s2 + $0xf8] sm:$0xff]
    %v51 = vlaneseq
    %v52 = vshrl.u32 %v51, 7
    %v53 = vsub.s32 0, %v52
    %v54 = vrot.slane %v17, %v53
    %v55 = vlaneseq
    %v56 = vshrl.u32 %v55, 7
    %v57 = vsub.s32 1, %v56
    %v58 = vrot.slane %v17, %v57
    %61 = vmatprep.subr.mxu0 0.0
    %62 = vmatpush1.msra.mxu0 %v33
    %63 = vmatprep.subr.mxu0 0.0
    %64 = vmatpush1.msra.mxu0 %v32
    %65 = vmatprep.subr.mxu0 0.0
    %66 = vmatpush1.msra.mxu0 %v31
    %67 = vmatprep.subr.mxu0 0.0
    %68 = vmatpush1.msra.mxu0 %v30
    %69 = vmatprep.subr.mxu0 0.0
    %70 = vmatpush1.msra.mxu0 %v29
    %71 = vmatprep.subr.mxu0 0.0
    %72 = vmatpush1.msra.mxu0 %v28
    %73 = vmatprep.subr.mxu0 0.0
    %74 = vmatpush1.msra.mxu0 %v27
    %75 = vmatprep.subr.mxu0 0.0
    %76 = vmatpush1.msra.mxu0 %v26
    %77 = vmatprep.subr.mxu0 0.0
    %78 = vmatpush1.msra.mxu0 %v25
    %79 = vmatprep.subr.mxu0 0.0
    %80 = vmatpush1.msra.mxu0 %v24
    %81 = vmatprep.subr.mxu0 0.0
    %82 = vmatpush1.msra.mxu0 %v23
    %83 = vmatprep.subr.mxu0 0.0
    %84 = vmatpush1.msra.mxu0 %v22
    %85 = vmatprep.subr.mxu0 0.0
    %86 = vmatpush1.msra.mxu0 %v21
    %87 = vmatprep.subr.mxu0 0.0
    %88 = vmatpush1.msra.mxu0 %v20
    %89 = vmatprep.subr.mxu0 0.0
    %90 = vmatpush1.msra.mxu0 %v19
    %91 = vmatprep.subr.mxu0 0.0
    %92 = vmatpush1.msra.mxu0 %v18
    %93 = vmatprep.subr.mxu0 0.0
    %94 = vmatpush2.msra.mxu0 %v49
    %95 = vmatprep.subr.mxu0 0.0
    %96 = vmatpush2.msra.mxu0 %v48
    %97 = vmatprep.subr.mxu0 0.0
    %98 = vmatpush2.msra.mxu0 %v47
    %99 = vmatprep.subr.mxu0 0.0
    %100 = vmatpush2.msra.mxu0 %v46
    %101 = vmatprep.subr.mxu0 0.0
    %102 = vmatpush2.msra.mxu0 %v45
    %103 = vmatprep.subr.mxu0 0.0
    %104 = vmatpush2.msra.mxu0 %v44
    %105 = vmatprep.subr.mxu0 0.0
    %106 = vmatpush2.msra.mxu0 %v43
    %107 = vmatprep.subr.mxu0 0.0
    %108 = vmatpush2.msra.mxu0 %v42
    %109 = vmatprep.subr.mxu0 0.0
    %110 = vmatpush2.msra.mxu0 %v41
    %111 = vmatprep.subr.mxu0 0.0
    %112 = vmatpush2.msra.mxu0 %v40
    %113 = vmatprep.subr.mxu0 0.0
    %114 = vmatpush2.msra.mxu0 %v39
    %115 = vmatprep.subr.mxu0 0.0
    %116 = vmatpush2.msra.mxu0 %v38
    %117 = vmatprep.subr.mxu0 0.0
    %118 = vmatpush2.msra.mxu0 %v37
    %119 = vmatprep.subr.mxu0 0.0
    %120 = vmatpush2.msra.mxu0 %v36
    %121 = vmatprep.subr.mxu0 0.0
    %122 = vmatpush2.msra.mxu0 %v35
    %123 = vmatprep.subr.mxu0 0.0
    %124 = vmatpush2.msra.mxu0 %v34
    %125 = vmatprep.mubr.f32.mxu0 %v58
    %126 = vmatmul.mubr.f32.gmra.mxu0 %v54
    %v127 = vpop.f32.mrf.mxu0
    %v128 = vadd.f32 0.0, %v127
    %v129 = vpop.f32.mrf.mxu0
    %130 = vdwg.mxu0
    %v131 = vstv %s16
    %v132 = vmin.f32 %v128, %v131
    %134 = vrot.lane.b32.xlu0 %v128, 120
    %v135 = vpop.permute.xlu0 %134
    %v137 = vadd.f32 %v132, %v135
    %vm138 = vcmask 57344
    %139 = vst.msk [vmem:[#allocation3] sm:$0x1] %vm138, %v137
    // Predicated region
    $region14: #{tpu_custom_call.1} parent=1 // pred_check
      _
    $region15: #{tpu_custom_call.1} parent=1 // pred_check_branch
      %141 = sbr.rel (0) target = $region17
    $region16: #{tpu_custom_call.1} parent=1 // pred_region
      %s143 = ssub.s32 16, 16
      %144 = vsyncadd [#allocation4], %s143
      %s146 = sshll.u32 [#allocation3], 4
      %s147 = int_to_ptr.vmem [resolvable:$true] %s146
      %149 = dma.vmem_to_hbm [thread:$0]  %s147, 16, %s3, [#allocation4]
    $region17: #{tpu_custom_call.1} parent=1 // pred_fallthru
      _
    // Predicated region
    $region18: #{tpu_custom_call.1} parent=1 // pred_check
      _
    $region19: #{tpu_custom_call.1} parent=1 // pred_check_branch
      %151 = sbr.rel (0) target = $region21
    $region20: #{tpu_custom_call.1} parent=1 // pred_region
      %152 = dma.done [#allocation4], 16
    $region21: #{tpu_custom_call.1} parent=1 // pred_fallthru
      _
    %153 = vsyncpa [#allocation4], 1

</llo_original>
